<compile_context>
chip_gen: v5e
topology: v5e:2x2
jax: 0.10.0
libtpu: 0.0.40
codegen_flags: <defaults>
</compile_context>

<pallas_src>
import math
from functools import partial

import jax
import jax.numpy as jnp
from jax import lax
from jax.experimental import pallas as pl
from jax.experimental.pallas import tpu as pltpu


# ---------------------------------------------------------------------------
# Bayesian weight sampling: W = mu + exp(log_sigma) * eps  (run once / forward)
# Row-tiled, with the compute-dtype cast fused into the store.
# ---------------------------------------------------------------------------
def _reparam_kernel(mu_ref, ls_ref, eps_ref, w_ref):
    w = mu_ref[...] + jnp.exp(ls_ref[...]) * eps_ref[...]      # f32 VPU + EUP
    w_ref[...] = w.astype(w_ref.dtype)


def sample_bayes_weight(mu, log_sigma, eps, out_dtype=jnp.float32, row_tile=256):
    rows, cols = mu.shape
    rt = min(rows, row_tile)
    spec = pl.BlockSpec((rt, cols), lambda i: (i, 0))
    return pl.pallas_call(
        _reparam_kernel,
        out_shape=jax.ShapeDtypeStruct((rows, cols), out_dtype),
        grid=(pl.cdiv(rows, rt),),
        in_specs=[spec, spec, spec],
        out_specs=spec,
        compiler_params=pltpu.CompilerParams(dimension_semantics=("parallel",)),
    )(mu, log_sigma, eps)


# ---------------------------------------------------------------------------
# Fused transformer block kernel (one grid step per batch-block of Bt elements)
# ---------------------------------------------------------------------------
def _block_kernel(*refs, scale, relu, use_ffn, has_mask):
    idx = 0
    x_ref = refs[idx]; idx += 1
    mask_ref = None
    if has_mask:
        mask_ref = refs[idx]; idx += 1
    wk_ref, wv_ref, wo_ref = refs[idx:idx + 3]; idx += 3
    if use_ffn:
        w1_ref, w2_ref = refs[idx:idx + 2]; idx += 2
    o_ref = refs[idx]

    Bt, S, D = x_ref.shape
    x3 = x_ref[...]                           # (Bt, S, D) f32
    cdt = wk_ref.dtype                        # MXU operand dtype (f32 or bf16)
    x2 = x3.reshape(Bt * S, D).astype(cdt)    # flattened rows feed the MXU

    # contraction on last dims of both operands == "a @ b.T" with no transpose
    nt = (((1,), (1,)), ((), ()))

    xk = lax.dot_general(x2, wk_ref[...], nt,
                         preferred_element_type=jnp.float32)      # (Bt*S, D)
    xv = lax.dot_general(x2, wv_ref[...], nt,
                         preferred_element_type=jnp.float32)      # (Bt*S, D)
    xk3 = xk.reshape(Bt, S, D).astype(cdt)
    xv3 = xv.reshape(Bt, S, D).astype(cdt)

    # pre-scale the query once (S*D muls instead of an extra S^2 pass)
    xq3 = (x3 * scale).astype(cdt)

    # scores[b, i, j] = <xq_b_i, xk_b_j> (+ mask)
    scores = jnp.einsum("bqd,bkd->bqk", xq3, xk3,
                        preferred_element_type=jnp.float32)        # (Bt, S, S)
    if has_mask:
        scores = scores + mask_ref[...]
    else:
        q_idx = lax.broadcasted_iota(jnp.int32, (S, S), 0)
        k_idx = lax.broadcasted_iota(jnp.int32, (S, S), 1)
        scores = jnp.where(k_idx <= q_idx, scores, -1e9)           # causal

    # numerically stable softmax; divide moved onto the EUP slot
    m = jnp.max(scores, axis=-1, keepdims=True)
    e = jnp.exp(scores - m)
    denom = jnp.sum(e, axis=-1, keepdims=True)
    attn = e * pl.reciprocal(denom, approx=True)

    # h = attn @ xv  (batched), then the row-wise Wo / FFN matmuls on the slab
    h3 = jnp.einsum("bqk,bkd->bqd", attn.astype(cdt), xv3,
                    preferred_element_type=jnp.float32)            # (Bt, S, D)
    h2 = h3.reshape(Bt * S, D).astype(cdt)
    attn_out = lax.dot_general(h2, wo_ref[...], nt,
                               preferred_element_type=jnp.float32)
    h_res = x3.reshape(Bt * S, D) + attn_out                       # residual 1

    if use_ffn:
        h1 = lax.dot_general(h_res.astype(cdt), w1_ref[...], nt,
                             preferred_element_type=jnp.float32)   # (Bt*S, H)
        if relu:
            h1 = jnp.maximum(h1, 0.0)
        ffn = lax.dot_general(h1.astype(cdt), w2_ref[...], nt,
                              preferred_element_type=jnp.float32)
        out = h_res + ffn                                          # residual 2
    else:
        out = h_res

    o_ref[...] = out.reshape(Bt, S, D).astype(o_ref.dtype)         # single store


def _choose_batch_tile(B, S, target_rows=256):
    """Largest divisor of B such that Bt*S approaches target_rows MXU rows."""
    bt = max(1, min(B, -(-target_rows // S)))
    while B % bt:
        bt -= 1
    return bt


def bayesian_transformer_block(x, wk, wv, wo, w1=None, w2=None, *, mask=None,
                               relu=True, single_buffer_weights=True):
    """x: (B, S, D) f32. mask: optional (S, S) additive mask; None => causal
    mask generated in-kernel. Weights are pre-sampled (see sample_bayes_weight)
    and may already be cast to the MXU compute dtype. Returns (B, S, D)."""
    B, S, D = x.shape
    use_ffn = w1 is not None
    has_mask = mask is not None
    H = w1.shape[0] if use_ffn else 0

    bt = _choose_batch_tile(B, S)
    grid = (B // bt,)

    kernel = partial(_block_kernel, scale=1.0 / math.sqrt(D),
                     relu=relu, use_ffn=use_ffn, has_mask=has_mask)

    x_spec = pl.BlockSpec((bt, S, D), lambda b: (b, 0, 0))

    weights = [wk, wv, wo] + ([w1, w2] if use_ffn else [])
    weight_bytes = sum(int(w.size) * w.dtype.itemsize for w in weights)
    mask_bytes = int(mask.size) * mask.dtype.itemsize if has_mask else 0
    x_block_bytes = bt * S * D * x.dtype.itemsize
    # rough in-kernel live-state estimate (scores/attn + row slabs), f32
    scratch_est = bt * S * S * 4 * 3 + bt * S * max(D, H or D) * 4 * 4
    need = 4 * x_block_bytes + 2 * (weight_bytes + mask_bytes) + scratch_est
    vmem_limit = max(32 << 20, min(int(need * 1.5) + (4 << 20), 64 << 20))

    flops = B * (3 * 2 * S * D * D + 2 * 2 * S * S * D
                 + (2 * 2 * S * D * H if use_ffn else 0))
    bytes_accessed = (2 * B * S * D * x.dtype.itemsize
                      + weight_bytes + mask_bytes)

    def _call(single_buffer):
        def resident(w):    # constant index_map -> stays resident in VMEM
            idx_map = lambda b: (0,) * w.ndim
            if single_buffer:
                return pl.BlockSpec(w.shape, idx_map,
                                    pipeline_mode=pl.Buffered(1))
            return pl.BlockSpec(w.shape, idx_map)

        in_specs = [x_spec]
        operands = [x]
        if has_mask:
            in_specs.append(resident(mask))
            operands.append(mask)
        in_specs += [resident(w) for w in weights]
        operands += weights

        return pl.pallas_call(
            kernel,
            out_shape=jax.ShapeDtypeStruct((B, S, D), x.dtype),
            grid=grid,
            in_specs=in_specs,
            out_specs=x_spec,
            compiler_params=pltpu.CompilerParams(
                dimension_semantics=("parallel",),
                vmem_limit_bytes=vmem_limit),
            cost_estimate=pl.CostEstimate(
                flops=flops, transcendentals=B * S * S,
                bytes_accessed=bytes_accessed),
        )(*operands)

    if single_buffer_weights:
        try:
            return _call(True)
        except Exception:
            # pl.Buffered(1) not supported by this Pallas build: fall back to
            # default double-buffered resident weights.
            pass
    return _call(False)


def init_bayes_linear(key, in_features, out_features, prior_sigma=1.0):
    """torchbnn-style init: mu ~ U(-stdv, stdv), log_sigma = log(prior_sigma)."""
    stdv = 1.0 / math.sqrt(in_features)
    mu = jax.random.uniform(key, (out_features, in_features),
                            minval=-stdv, maxval=stdv, dtype=jnp.float32)
    log_sigma = jnp.full((out_features, in_features),
                         math.log(prior_sigma), dtype=jnp.float32)
    return mu, log_sigma


if __name__ == "__main__":
    # Small but lane-dense shapes: dim multiple of 128, hidden = 4 * dim.
    batch, seq, dim, mlp_multiplier = 2, 8, 128, 4
    hidden = dim * mlp_multiplier
    prior_mu, prior_sigma = 0.0, 0.1   # prior_sigma is a module ctor parameter

    key = jax.random.PRNGKey(0)
    (kx, kk, kv, ko, k1, k2, kek, kev, keo, ke1, ke2) = jax.random.split(key, 11)

    x = jax.random.normal(kx, (batch, seq, dim), dtype=jnp.float32)
    causal = jnp.tril(jnp.ones((seq, seq), dtype=bool))
    mask = jnp.where(causal, 0.0, -1e9).astype(jnp.float32)

    mu_k, ls_k = init_bayes_linear(kk, dim, dim, prior_sigma)
    mu_v, ls_v = init_bayes_linear(kv, dim, dim, prior_sigma)
    mu_o, ls_o = init_bayes_linear(ko, dim, dim, prior_sigma)
    mu_1, ls_1 = init_bayes_linear(k1, dim, hidden, prior_sigma)
    mu_2, ls_2 = init_bayes_linear(k2, hidden, dim, prior_sigma)

    # per-forward weight noise (reparameterization trick)
    eps_k = jax.random.normal(kek, (dim, dim), dtype=jnp.float32)
    eps_v = jax.random.normal(kev, (dim, dim), dtype=jnp.float32)
    eps_o = jax.random.normal(keo, (dim, dim), dtype=jnp.float32)
    eps_1 = jax.random.normal(ke1, (hidden, dim), dtype=jnp.float32)
    eps_2 = jax.random.normal(ke2, (dim, hidden), dtype=jnp.float32)

    # Sample the Bayesian weights once (tiled reparameterization kernel).
    wk = sample_bayes_weight(mu_k, ls_k, eps_k)
    wv = sample_bayes_weight(mu_v, ls_v, eps_v)
    wo = sample_bayes_weight(mu_o, ls_o, eps_o)
    w1 = sample_bayes_weight(mu_1, ls_1, eps_1)
    w2 = sample_bayes_weight(mu_2, ls_2, eps_2)

    # Causal mask generated in-kernel (no S^2 HBM stream).
    out = bayesian_transformer_block(x, wk, wv, wo, w1, w2, mask=None)
    out = jax.block_until_ready(out)

    # Explicit additive-mask path (matches the PyTorch forward signature).
    out_mask = bayesian_transformer_block(x, wk, wv, wo, w1, w2, mask=mask)
    out_mask = jax.block_until_ready(out_mask)

    # ---- pure-JAX f32 reference (same math, highest precision) ----
    hi = jax.lax.Precision.HIGHEST
    wk_r = mu_k + jnp.exp(ls_k) * eps_k
    wv_r = mu_v + jnp.exp(ls_v) * eps_v
    wo_r = mu_o + jnp.exp(ls_o) * eps_o
    w1_r = mu_1 + jnp.exp(ls_1) * eps_1
    w2_r = mu_2 + jnp.exp(ls_2) * eps_2

    xk = jnp.einsum("bsd,kd->bsk", x, wk_r, precision=hi)
    xv = jnp.einsum("bsd,kd->bsk", x, wv_r, precision=hi)
    scores = jnp.einsum("bqd,bkd->bqk", x, xk, precision=hi) / math.sqrt(dim)
    scores = scores + mask
    attn = jax.nn.softmax(scores, axis=-1)
    h = jnp.einsum("bqk,bkd->bqd", attn, xv, precision=hi)
    h_res = x + jnp.einsum("bsd,od->bso", h, wo_r, precision=hi)
    h1 = jnp.maximum(jnp.einsum("bsd,hd->bsh", h_res, w1_r, precision=hi), 0.0)
    ref = h_res + jnp.einsum("bsh,dh->bsd", h1, w2_r, precision=hi)

    assert out.shape == (batch, seq, dim)
    assert jnp.allclose(out, ref, rtol=2e-2, atol=2e-2), float(
        jnp.max(jnp.abs(out - ref)))
    assert jnp.allclose(out_mask, ref, rtol=2e-2, atol=2e-2), float(
        jnp.max(jnp.abs(out_mask - ref)))

    # bf16-at-the-MXU path (recommended on v5e/v6e/v7x at real model dims):
    # the cast is fused into the sampling kernel's store; accumulation and all
    # VPU/EUP work (softmax, residuals) stay f32. Sanity-check finiteness.
    wk_b = sample_bayes_weight(mu_k, ls_k, eps_k, out_dtype=jnp.bfloat16)
    wv_b = sample_bayes_weight(mu_v, ls_v, eps_v, out_dtype=jnp.bfloat16)
    wo_b = sample_bayes_weight(mu_o, ls_o, eps_o, out_dtype=jnp.bfloat16)
    w1_b = sample_bayes_weight(mu_1, ls_1, eps_1, out_dtype=jnp.bfloat16)
    w2_b = sample_bayes_weight(mu_2, ls_2, eps_2, out_dtype=jnp.bfloat16)
    out_bf16 = bayesian_transformer_block(x, wk_b, wv_b, wo_b, w1_b, w2_b)
    out_bf16 = jax.block_until_ready(out_bf16)
    assert bool(jnp.all(jnp.isfinite(out_bf16)))

    print("KERNEL_OK")
</pallas_src>

<mosaic_0001>
module attributes {stable_mosaic.version = 11 : i64} {
  func.func @_reparam_kernel(%arg0: i32, %arg1: memref<128x128xf32, #tpu.memory_space<vmem>>, %arg2: memref<128x128xf32, #tpu.memory_space<vmem>>, %arg3: memref<128x128xf32, #tpu.memory_space<vmem>>, %arg4: memref<128x128xf32, #tpu.memory_space<vmem>>) attributes {dimension_semantics = [#tpu.dimension_semantics<parallel>], iteration_bounds = array<i64: 1>, scalar_prefetch = 0 : i64, scratch_operands = 0 : i64, tpu.core_type = #tpu.core_type<tc>, window_params = [{transform_indices = @transform_0, window_bounds = array<i64: 128, 128>}, {transform_indices = @transform_1, window_bounds = array<i64: 128, 128>}, {transform_indices = @transform_2, window_bounds = array<i64: 128, 128>}, {transform_indices = @transform_3, window_bounds = array<i64: 128, 128>}]} {
    %c0 = arith.constant 0 : index
    %c0_0 = arith.constant 0 : index
    %0 = vector.load %arg1[%c0, %c0_0] : memref<128x128xf32, #tpu.memory_space<vmem>>, vector<128x128xf32>
    %c0_1 = arith.constant 0 : index
    %c0_2 = arith.constant 0 : index
    %1 = vector.load %arg2[%c0_1, %c0_2] : memref<128x128xf32, #tpu.memory_space<vmem>>, vector<128x128xf32>
    %2 = math.exp %1 : vector<128x128xf32>
    %c0_3 = arith.constant 0 : index
    %c0_4 = arith.constant 0 : index
    %3 = vector.load %arg3[%c0_3, %c0_4] : memref<128x128xf32, #tpu.memory_space<vmem>>, vector<128x128xf32>
    %4 = arith.mulf %2, %3 : vector<128x128xf32>
    %5 = arith.addf %0, %4 : vector<128x128xf32>
    %c0_5 = arith.constant 0 : index
    %c0_6 = arith.constant 0 : index
    %6 = vector.load %arg4[%c0_5, %c0_6] : memref<128x128xf32, #tpu.memory_space<vmem>>, vector<128x128xf32>
    tpu.vector_store %arg4[%c0_5, %c0_6], %5 {strides = array<i32>} : memref<128x128xf32, #tpu.memory_space<vmem>>, vector<128x128xf32>,
    return
  }
  func.func @transform_0(%arg0: i32) -> (i32, i32) {
    %c0_i32 = arith.constant 0 : i32
    %c0_i32_0 = arith.constant 0 : i32
    return %arg0, %c0_i32 : i32, i32
  }
  func.func @transform_1(%arg0: i32) -> (i32, i32) {
    %c0_i32 = arith.constant 0 : i32
    %c0_i32_0 = arith.constant 0 : i32
    return %arg0, %c0_i32 : i32, i32
  }
  func.func @transform_2(%arg0: i32) -> (i32, i32) {
    %c0_i32 = arith.constant 0 : i32
    %c0_i32_0 = arith.constant 0 : i32
    return %arg0, %c0_i32 : i32, i32
  }
  func.func @transform_3(%arg0: i32) -> (i32, i32) {
    %c0_i32 = arith.constant 0 : i32
    %c0_i32_0 = arith.constant 0 : i32
    return %arg0, %c0_i32 : i32, i32
  }
}

</mosaic_0001>

<llo_original>
// kernel: tpu_custom_call.1
$region0: #{tpu_custom_call.1}
  #allocation0 [shape = 'u32[]', space=smem, size = 0x4, offset = 0x4, fixed_abs, tag = 'smem constant byte address 0x4 - core index']
  #allocation1 [shape = 'u32[72,128]{1,0:T(1,128)}', space=vmem, size = 0x9000, scoped, tag = 'internal scratch']
  %s0 = inlined_call_operand.hbm [shape: f32[128,128], index: 0, kind: input, shape index: {}]
  %s1 = inlined_call_operand.hbm [shape: f32[128,128], index: 1, kind: input, shape index: {}]
  %s2 = inlined_call_operand.hbm [shape: f32[128,128], index: 2, kind: input, shape index: {}]
  %s3 = inlined_call_operand.hbm [shape: f32[128,128], index: 3, kind: output, shape index: {}]
  %s4 = sld [smem:[#allocation0]]
  $region34: #{tpu_custom_call.1} parent=0
    _
  %s6 = ssub.s32 1, %s4
  %s7 = scalar_select 0, %s6, %s4
  $region1: #{tpu_custom_call.1} parent=0
    #allocation2 [shape = 'u8[65536]{0}', space=vmem, size = 0x10000, scoped, tag = 'input window, operand 0, single buffered']
    #allocation3 [shape = 's32[1]{0}', space=sflag, size = 0x4, scoped, tag = 'scoped memory for tpu_custom_call.1']
    #allocation4 [shape = 's32[1]{0}', space=sflag, size = 0x4, scoped, tag = 'scoped memory for tpu_custom_call.1']
    #allocation5 [shape = 'u8[65536]{0}', space=vmem, size = 0x10000, scoped, tag = 'input window, operand 1, single buffered']
    #allocation6 [shape = 's32[1]{0}', space=sflag, size = 0x4, scoped, tag = 'scoped memory for tpu_custom_call.1']
    #allocation7 [shape = 'u8[65536]{0}', space=vmem, size = 0x10000, scoped, tag = 'input window, operand 2, single buffered']
    #allocation8 [shape = 'u8[65536]{0}', space=vmem, size = 0x10000, scoped, tag = 'output window, operand 0, single buffered']
    %8 = vsyncpa [#allocation3], 0
    %9 = vsyncpa [#allocation6], 0
    %10 = vsyncpa [#allocation4], 0
    // Predicated region
    $region2: #{tpu_custom_call.1} parent=1 // pred_check
      _
    $region3: #{tpu_custom_call.1} parent=1 // pred_check_branch
      %12 = sbr.rel (0) target = $region5
    $region4: #{tpu_custom_call.1} parent=1 // pred_region
      %14 = vsyncadd [#allocation3], 0
      %s15 = sshll.u32 %s0, 4
      %s16 = int_to_ptr.hbm [resolvable:$true] %s15
      %s17 = sshll.u32 [#allocation2], 4
      %s18 = int_to_ptr.vmem [resolvable:$true] %s17
      %23 = dma.hbm_to_vmem [thread:$0]  %s16, 2048, %s18, [#allocation3], 128, 128, 8
    $region5: #{tpu_custom_call.1} parent=1 // pred_fallthru
      _
    // Predicated region
    $region6: #{tpu_custom_call.1} parent=1 // pred_check
      _
    $region7: #{tpu_custom_call.1} parent=1 // pred_check_branch
      %25 = sbr.rel (0) target = $region9
    $region8: #{tpu_custom_call.1} parent=1 // pred_region
      %27 = vsyncadd [#allocation6], 0
      %s28 = sshll.u32 %s1, 4
      %s29 = int_to_ptr.hbm [resolvable:$true] %s28
      %s30 = sshll.u32 [#allocation5], 4
      %s31 = int_to_ptr.vmem [resolvable:$true] %s30
      %36 = dma.hbm_to_vmem [thread:$0]  %s29, 2048, %s31, [#allocation6], 128, 128, 8
    $region9: #{tpu_custom_call.1} parent=1 // pred_fallthru
      _
    // Predicated region
    $region10: #{tpu_custom_call.1} parent=1 // pred_check
      _
    $region11: #{tpu_custom_call.1} parent=1 // pred_check_branch
      %38 = sbr.rel (0) target = $region13
    $region12: #{tpu_custom_call.1} parent=1 // pred_region
      %40 = vsyncadd [#allocation6], 0
      %s41 = sshll.u32 %s2, 4
      %s42 = int_to_ptr.hbm [resolvable:$true] %s41
      %s43 = sshll.u32 [#allocation7], 4
      %s44 = int_to_ptr.vmem [resolvable:$true] %s43
      %49 = dma.hbm_to_vmem [thread:$0]  %s42, 2048, %s44, [#allocation6], 128, 128, 8
    $region13: #{tpu_custom_call.1} parent=1 // pred_fallthru
      _
    // Predicated region
    $region14: #{tpu_custom_call.1} parent=1 // pred_check
      _
    $region15: #{tpu_custom_call.1} parent=1 // pred_check_branch
      %51 = sbr.rel (0) target = $region17
    $region16: #{tpu_custom_call.1} parent=1 // pred_region
      %53 = dma.done [#allocation3], 2048
    $region17: #{tpu_custom_call.1} parent=1 // pred_fallthru
      _
    // Predicated region
    $region18: #{tpu_custom_call.1} parent=1 // pred_check
      _
    $region19: #{tpu_custom_call.1} parent=1 // pred_check_branch
      %55 = sbr.rel (0) target = $region21
    $region20: #{tpu_custom_call.1} parent=1 // pred_region
      %57 = dma.done [#allocation6], 2048
    $region21: #{tpu_custom_call.1} parent=1 // pred_fallthru
      _
    // Predicated region
    $region22: #{tpu_custom_call.1} parent=1 // pred_check
      _
    $region23: #{tpu_custom_call.1} parent=1 // pred_check_branch
      %59 = sbr.rel (0) target = $region25
    $region24: #{tpu_custom_call.1} parent=1 // pred_region
      %61 = dma.done [#allocation6], 2048
    $region25: #{tpu_custom_call.1} parent=1 // pred_fallthru
      _
    %v62 = vld [vmem:[#allocation2] sm:$0xff]
    %v63 = vld [vmem:[#allocation2 + $0x8] sm:$0xff]
    %v64 = vld [vmem:[#allocation2 + $0x10] sm:$0xff]
    %v65 = vld [vmem:[#allocation2 + $0x18] sm:$0xff]
    %v66 = vld [vmem:[#allocation2 + $0x20] sm:$0xff]
    %v67 = vld [vmem:[#allocation2 + $0x28] sm:$0xff]
    %v68 = vld [vmem:[#allocation2 + $0x30] sm:$0xff]
    %v69 = vld [vmem:[#allocation2 + $0x38] sm:$0xff]
    %v70 = vld [vmem:[#allocation2 + $0x40] sm:$0xff]
    %v71 = vld [vmem:[#allocation2 + $0x48] sm:$0xff]
    %v72 = vld [vmem:[#allocation2 + $0x50] sm:$0xff]
    %v73 = vld [vmem:[#allocation2 + $0x58] sm:$0xff]
    %v74 = vld [vmem:[#allocation2 + $0x60] sm:$0xff]
    %v75 = vld [vmem:[#allocation2 + $0x68] sm:$0xff]
    %v76 = vld [vmem:[#allocation2 + $0x70] sm:$0xff]
    %v77 = vld [vmem:[#allocation2 + $0x78] sm:$0xff]
    %v78 = vld [vmem:[#allocation5] sm:$0xff]
    %v79 = vld [vmem:[#allocation5 + $0x8] sm:$0xff]
    %v80 = vld [vmem:[#allocation5 + $0x10] sm:$0xff]
    %v81 = vld [vmem:[#allocation5 + $0x18] sm:$0xff]
    %v82 = vld [vmem:[#allocation5 + $0x20] sm:$0xff]
    %v83 = vld [vmem:[#allocation5 + $0x28] sm:$0xff]
    %v84 = vld [vmem:[#allocation5 + $0x30] sm:$0xff]
    %v85 = vld [vmem:[#allocation5 + $0x38] sm:$0xff]
    %v86 = vld [vmem:[#allocation5 + $0x40] sm:$0xff]
    %v87 = vld [vmem:[#allocation5 + $0x48] sm:$0xff]
    %v88 = vld [vmem:[#allocation5 + $0x50] sm:$0xff]
    %v89 = vld [vmem:[#allocation5 + $0x58] sm:$0xff]
    %v90 = vld [vmem:[#allocation5 + $0x60] sm:$0xff]
    %v91 = vld [vmem:[#allocation5 + $0x68] sm:$0xff]
    %v92 = vld [vmem:[#allocation5 + $0x70] sm:$0xff]
    %v93 = vld [vmem:[#allocation5 + $0x78] sm:$0xff]
    %v94 = vmul.f32 %v78, 1.442695
    %v95 = vpow.pop %v94
    %v96 = vmul.f32 %v79, 1.442695
    %v97 = vpow.pop %v96
    %v98 = vmul.f32 %v80, 1.442695
    %v99 = vpow.pop %v98
    %v100 = vmul.f32 %v81, 1.442695
    %v101 = vpow.pop %v100
    %v102 = vmul.f32 %v82, 1.442695
    %v103 = vpow.pop %v102
    %v104 = vmul.f32 %v83, 1.442695
    %v105 = vpow.pop %v104
    %v106 = vmul.f32 %v84, 1.442695
    %v107 = vpow.pop %v106
    %v108 = vmul.f32 %v85, 1.442695
    %v109 = vpow.pop %v108
    %v110 = vmul.f32 %v86, 1.442695
    %v111 = vpow.pop %v110
    %v112 = vmul.f32 %v87, 1.442695
    %v113 = vpow.pop %v112
    %v114 = vmul.f32 %v88, 1.442695
    %v115 = vpow.pop %v114
    %v116 = vmul.f32 %v89, 1.442695
    %v117 = vpow.pop %v116
    %v118 = vmul.f32 %v90, 1.442695
    %v119 = vpow.pop %v118
    %v120 = vmul.f32 %v91, 1.442695
    %v121 = vpow.pop %v120
    %v122 = vmul.f32 %v92, 1.442695
    %v123 = vpow.pop %v122
    %v124 = vmul.f32 %v93, 1.442695
    %v125 = vpow.pop %v124
    %v126 = vld [vmem:[#allocation7] sm:$0xff]
    %v127 = vld [vmem:[#allocation7 + $0x8] sm:$0xff]
    %v128 = vld [vmem:[#allocation7 + $0x10] sm:$0xff]
    %v129 = vld [vmem:[#allocation7 + $0x18] sm:$0xff]
    %v130 = vld [vmem:[#allocation7 + $0x20] sm:$0xff]
    %v131 = vld [vmem:[#allocation7 + $0x28] sm:$0xff]
    %v132 = vld [vmem:[#allocation7 + $0x30] sm:$0xff]
    %v133 = vld [vmem:[#allocation7 + $0x38] sm:$0xff]
    %v134 = vld [vmem:[#allocation7 + $0x40] sm:$0xff]
    %v135 = vld [vmem:[#allocation7 + $0x48] sm:$0xff]
    %v136 = vld [vmem:[#allocation7 + $0x50] sm:$0xff]
    %v137 = vld [vmem:[#allocation7 + $0x58] sm:$0xff]
    %v138 = vld [vmem:[#allocation7 + $0x60] sm:$0xff]
    %v139 = vld [vmem:[#allocation7 + $0x68] sm:$0xff]
    %v140 = vld [vmem:[#allocation7 + $0x70] sm:$0xff]
    %v141 = vld [vmem:[#allocation7 + $0x78] sm:$0xff]
    %v142 = vmul.f32 %v95, %v126
    %v143 = vmul.f32 %v97, %v127
    %v144 = vmul.f32 %v99, %v128
    %v145 = vmul.f32 %v101, %v129
    %v146 = vmul.f32 %v103, %v130
    %v147 = vmul.f32 %v105, %v131
    %v148 = vmul.f32 %v107, %v132
    %v149 = vmul.f32 %v109, %v133
    %v150 = vmul.f32 %v111, %v134
    %v151 = vmul.f32 %v113, %v135
    %v152 = vmul.f32 %v115, %v136
    %v153 = vmul.f32 %v117, %v137
    %v154 = vmul.f32 %v119, %v138
    %v155 = vmul.f32 %v121, %v139
    %v156 = vmul.f32 %v123, %v140
    %v157 = vmul.f32 %v125, %v141
    %v158 = vadd.f32 %v62, %v142
    %v159 = vadd.f32 %v63, %v143
    %v160 = vadd.f32 %v64, %v144
    %v161 = vadd.f32 %v65, %v145
    %v162 = vadd.f32 %v66, %v146
    %v163 = vadd.f32 %v67, %v147
    %v164 = vadd.f32 %v68, %v148
    %v165 = vadd.f32 %v69, %v149
    %v166 = vadd.f32 %v70, %v150
    %v167 = vadd.f32 %v71, %v151
    %v168 = vadd.f32 %v72, %v152
    %v169 = vadd.f32 %v73, %v153
    %v170 = vadd.f32 %v74, %v154
    %v171 = vadd.f32 %v75, %v155
    %v172 = vadd.f32 %v76, %v156
    %v173 = vadd.f32 %v77, %v157
    %174 = vst [vmem:[#allocation8] sm:$0xff] %v158
    %175 = vst [vmem:[#allocation8 + $0x8] sm:$0xff] %v159
    %176 = vst [vmem:[#allocation8 + $0x10] sm:$0xff] %v160
    %177 = vst [vmem:[#allocation8 + $0x18] sm:$0xff] %v161
    %178 = vst [vmem:[#allocation8 + $0x20] sm:$0xff] %v162
    %179 = vst [vmem:[#allocation8 + $0x28] sm:$0xff] %v163
    %180 = vst [vmem:[#allocation8 + $0x30] sm:$0xff] %v164
    %181 = vst [vmem:[#allocation8 + $0x38] sm:$0xff] %v165
    %182 = vst [vmem:[#allocation8 + $0x40] sm:$0xff] %v166
    %183 = vst [vmem:[#allocation8 + $0x48] sm:$0xff] %v167
    %184 = vst [vmem:[#allocation8 + $0x50] sm:$0xff] %v168
    %185 = vst [vmem:[#allocation8 + $0x58] sm:$0xff] %v169
    %186 = vst [vmem:[#allocation8 + $0x60] sm:$0xff] %v170
    %187 = vst [vmem:[#allocation8 + $0x68] sm:$0xff] %v171
    %188 = vst [vmem:[#allocation8 + $0x70] sm:$0xff] %v172
    %189 = vst [vmem:[#allocation8 + $0x78] sm:$0xff] %v173
    // Predicated region
    $region26: #{tpu_custom_call.1} parent=1 // pred_check
      _
    $region27: #{tpu_custom_call.1} parent=1 // pred_check_branch
      %191 = sbr.rel (0) target = $region29
    $region28: #{tpu_custom_call.1} parent=1 // pred_region
      %193 = vsyncadd [#allocation4], 0
      %s194 = sshll.u32 [#allocation8], 4
      %s195 = int_to_ptr.vmem [resolvable:$true] %s194
      %s196 = sshll.u32 %s3, 4
      %s197 = int_to_ptr.hbm [resolvable:$true] %s196
      %202 = dma.vmem_to_hbm [thread:$0]  %s195, 2048, %s197, [#allocation4], 128, 128, 8
    $region29: #{tpu_custom_call.1} parent=1 // pred_fallthru
      _
    // Predicated region
    $region30: #{tpu_custom_call.1} parent=1 // pred_check
      _
    $region31: #{tpu_custom_call.1} parent=1 // pred_check_branch
      %204 = sbr.rel (0) target = $region33
    $region32: #{tpu_custom_call.1} parent=1 // pred_region
      %206 = dma.done [#allocation4], 2048
    $region33: #{tpu_custom_call.1} parent=1 // pred_fallthru
      _
    %207 = vsyncpa [#allocation3], 1
    %208 = vsyncpa [#allocation6], 1
    %209 = vsyncpa [#allocation4], 1

</llo_original>
